<compile_context>
chip_gen: v7x
topology: tpu7x:2x2x1
jax: 0.10.0
libtpu: 0.0.40
codegen_flags: <defaults>
</compile_context>

<pallas_src>
import math
import jax
import jax.numpy as jnp
from jax.experimental import pallas as pl
from jax.experimental.pallas import tpu as pltpu


def _kernel(q_ref, keys_ref, aqT_ref, akT_ref, o_ref):
    """q:[D,tB]  keys:[N,D,tB]  aqT/akT:[K,D]  o:[D,tB].  B stays on lanes."""
    N = keys_ref.shape[0]
    q = q_ref[...]
    aqT = aqT_ref[...]
    akT = akT_ref[...]
    K = aqT.shape[0]

    # logits[n,k,b] = sum_d aqT[k,d]*q[d,b] + sum_d akT[k,d]*keys[n,d,b]
    # D-contraction on the MXU (vector-extended slot, idle otherwise); the
    # [K, tB] results keep B lane-dense for the whole softmax path.
    qa = jnp.dot(aqT, q, preferred_element_type=jnp.float32)            # [K, tB]

    # Pass 1 over paths (N is small & static): logits + LeakyReLU + running max.
    acts = []
    m = None
    for n in range(N):
        s = qa + jnp.dot(akT, keys_ref[n], preferred_element_type=jnp.float32)
        a = jnp.where(s >= 0, s, 0.2 * s)          # LeakyReLU(negative_slope=0.2)
        acts.append(a)                              # [K, tB] f32
        m = a if m is None else jnp.maximum(m, a)

    # Pass 2: numerically-stabilized softmax over the num_query_path axis.
    exps = [jnp.exp(a - m) for a in acts]
    denom = exps[0]
    for e in exps[1:]:
        denom = denom + e
    inv = pl.reciprocal(denom, approx=True)         # EUP slot        [K, tB]

    # combined[d,b] = (1/K) * sum_n (sum_k attn[n,k,b]) * keys[n,d,b]
    combined = jnp.zeros(o_ref.shape, jnp.float32)                      # [D, tB]
    for n in range(N):
        w_n = jnp.sum(exps[n] * inv, axis=0, keepdims=True)             # [1, tB]
        combined = combined + w_n * keys_ref[n].astype(jnp.float32)
    o_ref[...] = jax.nn.sigmoid(combined * (1.0 / K)).astype(o_ref.dtype)


def _vmem_budget():
    """Generation-aware VMEM budget.

    ~45% of physical VMEM for the keys-tile working set (v5e/v6e: 128 MiB
    physical -> ~58 MiB budget; v7x: 64 MiB -> ~29 MiB), plus a raised scoped
    limit so Mosaic actually lets us use it."""
    cap = 64 * 1024 * 1024                      # conservative fallback (v7x-sized)
    try:
        c = int(getattr(pltpu.get_tpu_info(), "vmem_capacity_bytes", 0))
        if c > 0:
            cap = c
    except Exception:
        pass
    budget = int(cap * 0.45)
    limit = min(cap, budget + budget // 2 + (8 << 20))
    return budget, int(limit)


def _pick_tile_b(B, N, D, K, in_esz, budget_bytes):
    """Largest lane-dense B tile whose real working set fits `budget_bytes`.

    Accounts for keys/q double-buffered DMA at the HBM storage dtype, the f32
    output double-buffer, the f32 accumulator and the per-path [K, tB] softmax
    slabs the kernel actually holds (no [N,K,D,tB] temporary exists)."""
    if B <= 128:
        return B
    r128 = lambda x: ((x + 127) // 128) * 128
    Bpad = r128(B)
    per_col = (2 * N * D + 2 * D) * in_esz           # keys + q double buffers
    per_col += (2 * D + 3 * D) * 4                   # f32 out dbuf + acc + transient slice
    per_col += (2 * N * K + 6 * K + 8) * 4           # logits/exp slabs + softmax temps
    tb = max(128, (budget_bytes // per_col) // 128 * 128)
    tb = min(tb, Bpad)
    # v7x has 2 TensorCores: prefer an even number of tiles on the 'parallel'
    # axis when that still leaves >= 512 lanes/tile (HBM-efficiency floor).
    ntiles = -(-Bpad // tb)
    if ntiles % 2 == 1:
        even = ntiles + 1 if ntiles > 1 else 2
        tb_even = r128(-(-Bpad // even))
        if tb_even >= 512:
            tb = tb_even
    return tb


def intersect_concat_attention(query_embed, key_embeds, atten_vecs, num_attn,
                               tile_b=None, storage_dtype=jnp.bfloat16):
    """query_embed: [1, D, B], key_embeds: [N, D, B], atten_vecs: [2D, K].
    Returns [D, B] (same as the PyTorch module's forward).

    storage_dtype: HBM dtype of the big tensors (bf16 default halves HBM
    traffic on this bandwidth-bound kernel; accumulation stays f32).  Pass
    jnp.float32, or None to keep the caller's dtype, for full f32 precision."""
    _, D, B = query_embed.shape
    N = key_embeds.shape[0]
    K = atten_vecs.shape[1]
    assert atten_vecs.shape[0] == 2 * D and K == num_attn

    sdt = jnp.dtype(key_embeds.dtype) if storage_dtype is None else jnp.dtype(storage_dtype)
    # Native [*, B] layout goes straight in: no wrapper transposes of the big
    # tensors.  Only the tiny [2D, K] parameter is split/transposed (would be
    # precomputed once in a real deployment).
    q = query_embed[0].astype(sdt)                   # [D, B]
    keys = key_embeds.astype(sdt)                    # [N, D, B]
    aqT = atten_vecs[:D].T.astype(sdt)               # [K, D]  (query half)
    akT = atten_vecs[D:].T.astype(sdt)               # [K, D]  (key half)

    budget, vmem_limit = _vmem_budget()
    esz = sdt.itemsize
    tb = _pick_tile_b(B, N, D, K, esz, budget) if tile_b is None else tile_b
    grid = (pl.cdiv(B, tb),)

    cost = pl.CostEstimate(
        flops=2 * N * K * D * B + 2 * K * D * B + 2 * N * D * B + 8 * N * K * B,
        transcendentals=N * K * B + K * B + D * B,
        bytes_accessed=esz * (N * D * B + D * B + 4 * K * D) + 4 * D * B,
    )

    out = pl.pallas_call(
        _kernel,
        out_shape=jax.ShapeDtypeStruct((D, B), jnp.float32),
        grid=grid,
        in_specs=[
            pl.BlockSpec((D, tb), lambda i: (0, i)),          # q     [D, B]
            pl.BlockSpec((N, D, tb), lambda i: (0, 0, i)),    # keys  [N, D, B]
            pl.BlockSpec((K, D), lambda i: (0, 0)),           # aqT   (resident)
            pl.BlockSpec((K, D), lambda i: (0, 0)),           # akT   (resident)
        ],
        out_specs=pl.BlockSpec((D, tb), lambda i: (0, i)),    # out [D, B], no transpose
        compiler_params=pltpu.CompilerParams(
            dimension_semantics=("parallel",),
            vmem_limit_bytes=vmem_limit),
        cost_estimate=cost,
    )(q, keys, aqT, akT)
    return out


def _reference(query_embed, key_embeds, atten_vecs, num_attn):
    """Plain-JAX f32 transliteration of the PyTorch forward (sanity check)."""
    N, D, B = key_embeds.shape
    q_exp = jnp.broadcast_to(query_embed[0][None], (N, D, B))
    concat = jnp.concatenate([q_exp, key_embeds], axis=1).transpose(0, 2, 1)  # [N,B,2D]
    attn = jnp.einsum('nbd,dk->nbk', concat, atten_vecs)
    attn = jnp.where(attn >= 0, attn, 0.2 * attn)
    attn = jax.nn.softmax(attn, axis=0)
    attn = attn.transpose(1, 2, 0)                        # [B, K, N]
    keys_ = key_embeds.transpose(2, 0, 1)                 # [B, N, D]
    combined = jnp.einsum('bkn,bnd->bkd', attn, keys_)
    combined = jnp.sum(combined, axis=1) * (1.0 / num_attn)
    return jax.nn.sigmoid(combined).T                     # [D, B]


if __name__ == "__main__":
    # Small shapes consistent with the module's forward.
    D = 32          # embed_dim (query_dims[mode] == key_dims[mode])
    B = 16          # batch_size
    N = 4           # num_query_path
    K = 2           # num_attn

    key = jax.random.PRNGKey(0)
    k1, k2, k3 = jax.random.split(key, 3)
    query_embed = jax.random.normal(k1, (1, D, B), dtype=jnp.float32)
    key_embeds = jax.random.normal(k2, (N, D, B), dtype=jnp.float32)
    bound = math.sqrt(6.0 / (2 * D + K))                  # xavier_uniform-style init
    atten_vecs = jax.random.uniform(k3, (2 * D, K), jnp.float32, -bound, bound)

    ref = _reference(query_embed, key_embeds, atten_vecs, K)

    # Full-precision (f32-in-HBM) path.
    out_f32 = jax.block_until_ready(
        intersect_concat_attention(query_embed, key_embeds, atten_vecs, K,
                                   storage_dtype=jnp.float32))
    assert out_f32.shape == (D, B)
    assert jnp.allclose(out_f32, ref, atol=3e-3, rtol=3e-3), \
        float(jnp.max(jnp.abs(out_f32 - ref)))

    # Default bandwidth-optimized path (bf16 in HBM, f32 accumulate).
    out_bf16 = jax.block_until_ready(
        intersect_concat_attention(query_embed, key_embeds, atten_vecs, K))
    assert jnp.allclose(out_bf16, ref, atol=3e-2, rtol=3e-2), \
        float(jnp.max(jnp.abs(out_bf16 - ref)))

    # Multi-step 'parallel' grid path (B=256 split into two 128-lane tiles).
    B2 = 256
    kk1, kk2 = jax.random.split(jax.random.PRNGKey(1))
    qe2 = jax.random.normal(kk1, (1, D, B2), dtype=jnp.float32)
    ke2 = jax.random.normal(kk2, (N, D, B2), dtype=jnp.float32)
    ref2 = _reference(qe2, ke2, atten_vecs, K)
    out2 = jax.block_until_ready(
        intersect_concat_attention(qe2, ke2, atten_vecs, K,
                                   tile_b=128, storage_dtype=jnp.float32))
    assert out2.shape == (D, B2)
    assert jnp.allclose(out2, ref2, atol=3e-3, rtol=3e-3), \
        float(jnp.max(jnp.abs(out2 - ref2)))

    # Auto tile selection under the generation-aware VMEM budget (bf16 default).
    out3 = jax.block_until_ready(
        intersect_concat_attention(qe2, ke2, atten_vecs, K))
    assert jnp.allclose(out3, ref2, atol=3e-2, rtol=3e-2), \
        float(jnp.max(jnp.abs(out3 - ref2)))

    print("KERNEL_OK")
</pallas_src>

<mosaic_0001>
module attributes {stable_mosaic.version = 11 : i64} {
  func.func @_kernel(%arg0: i32, %arg1: memref<32x16xf32, #tpu.memory_space<vmem>>, %arg2: memref<4x32x16xf32, #tpu.memory_space<vmem>>, %arg3: memref<2x32xf32, #tpu.memory_space<vmem>>, %arg4: memref<2x32xf32, #tpu.memory_space<vmem>>, %arg5: memref<32x16xf32, #tpu.memory_space<vmem>>) attributes {dimension_semantics = [#tpu.dimension_semantics<parallel>], iteration_bounds = array<i64: 1>, scalar_prefetch = 0 : i64, scratch_operands = 0 : i64, tpu.core_type = #tpu.core_type<tc>, window_params = [{transform_indices = @transform_0, window_bounds = array<i64: 32, 16>}, {transform_indices = @transform_1, window_bounds = array<i64: 4, 32, 16>}, {pipeline_mode = #tpu.pipeline_mode<synchronous>, transform_indices = @transform_2, window_bounds = array<i64: 2, 32>}, {pipeline_mode = #tpu.pipeline_mode<synchronous>, transform_indices = @transform_3, window_bounds = array<i64: 2, 32>}, {transform_indices = @transform_4, window_bounds = array<i64: 32, 16>}]} {
    %c0 = arith.constant 0 : index
    %c0_0 = arith.constant 0 : index
    %0 = vector.load %arg1[%c0, %c0_0] : memref<32x16xf32, #tpu.memory_space<vmem>>, vector<32x16xf32>
    %c0_1 = arith.constant 0 : index
    %c0_2 = arith.constant 0 : index
    %1 = vector.load %arg3[%c0_1, %c0_2] : memref<2x32xf32, #tpu.memory_space<vmem>>, vector<2x32xf32>
    %c0_3 = arith.constant 0 : index
    %c0_4 = arith.constant 0 : index
    %2 = vector.load %arg4[%c0_3, %c0_4] : memref<2x32xf32, #tpu.memory_space<vmem>>, vector<2x32xf32>
    %cst = arith.constant dense<0.000000e+00> : vector<2x16xf32>
    %3 = tpu.matmul %1, %0, %cst {dimension_numbers = #tpu.dot_dimension_numbers<[1], [0], [0], [1], [0, 0, 1, 1], [], []>} : vector<2x32xf32>, vector<32x16xf32>, vector<2x16xf32> -> vector<2x16xf32>
    %c0_5 = arith.constant 0 : index
    %c0_6 = arith.constant 0 : index
    %c0_7 = arith.constant 0 : index
    %4 = vector.load %arg2[%c0_5, %c0_6, %c0_7] : memref<4x32x16xf32, #tpu.memory_space<vmem>>, vector<1x32x16xf32>
    %5 = vector.shape_cast %4 : vector<1x32x16xf32> to vector<32x16xf32>
    %cst_8 = arith.constant dense<0.000000e+00> : vector<2x16xf32>
    %6 = tpu.matmul %2, %5, %cst_8 {dimension_numbers = #tpu.dot_dimension_numbers<[1], [0], [0], [1], [0, 0, 1, 1], [], []>} : vector<2x32xf32>, vector<32x16xf32>, vector<2x16xf32> -> vector<2x16xf32>
    %7 = arith.addf %3, %6 : vector<2x16xf32>
    %cst_9 = arith.constant 0.000000e+00 : f32
    %8 = vector.broadcast %cst_9 : f32 to vector<2x16xf32>
    %9 = arith.cmpf oge, %7, %8 : vector<2x16xf32>
    %cst_10 = arith.constant 2.000000e-01 : f32
    %10 = vector.broadcast %cst_10 : f32 to vector<2x16xf32>
    %11 = arith.mulf %10, %7 : vector<2x16xf32>
    %12 = arith.select %9, %7, %11 : vector<2x16xi1>, vector<2x16xf32>
    %c1 = arith.constant 1 : index
    %c0_11 = arith.constant 0 : index
    %c0_12 = arith.constant 0 : index
    %13 = vector.load %arg2[%c1, %c0_11, %c0_12] : memref<4x32x16xf32, #tpu.memory_space<vmem>>, vector<1x32x16xf32>
    %14 = vector.shape_cast %13 : vector<1x32x16xf32> to vector<32x16xf32>
    %cst_13 = arith.constant dense<0.000000e+00> : vector<2x16xf32>
    %15 = tpu.matmul %2, %14, %cst_13 {dimension_numbers = #tpu.dot_dimension_numbers<[1], [0], [0], [1], [0, 0, 1, 1], [], []>} : vector<2x32xf32>, vector<32x16xf32>, vector<2x16xf32> -> vector<2x16xf32>
    %16 = arith.addf %3, %15 : vector<2x16xf32>
    %cst_14 = arith.constant 0.000000e+00 : f32
    %17 = vector.broadcast %cst_14 : f32 to vector<2x16xf32>
    %18 = arith.cmpf oge, %16, %17 : vector<2x16xf32>
    %cst_15 = arith.constant 2.000000e-01 : f32
    %19 = vector.broadcast %cst_15 : f32 to vector<2x16xf32>
    %20 = arith.mulf %19, %16 : vector<2x16xf32>
    %21 = arith.select %18, %16, %20 : vector<2x16xi1>, vector<2x16xf32>
    %22 = arith.maximumf %12, %21 : vector<2x16xf32>
    %c2 = arith.constant 2 : index
    %c0_16 = arith.constant 0 : index
    %c0_17 = arith.constant 0 : index
    %23 = vector.load %arg2[%c2, %c0_16, %c0_17] : memref<4x32x16xf32, #tpu.memory_space<vmem>>, vector<1x32x16xf32>
    %24 = vector.shape_cast %23 : vector<1x32x16xf32> to vector<32x16xf32>
    %cst_18 = arith.constant dense<0.000000e+00> : vector<2x16xf32>
    %25 = tpu.matmul %2, %24, %cst_18 {dimension_numbers = #tpu.dot_dimension_numbers<[1], [0], [0], [1], [0, 0, 1, 1], [], []>} : vector<2x32xf32>, vector<32x16xf32>, vector<2x16xf32> -> vector<2x16xf32>
    %26 = arith.addf %3, %25 : vector<2x16xf32>
    %cst_19 = arith.constant 0.000000e+00 : f32
    %27 = vector.broadcast %cst_19 : f32 to vector<2x16xf32>
    %28 = arith.cmpf oge, %26, %27 : vector<2x16xf32>
    %cst_20 = arith.constant 2.000000e-01 : f32
    %29 = vector.broadcast %cst_20 : f32 to vector<2x16xf32>
    %30 = arith.mulf %29, %26 : vector<2x16xf32>
    %31 = arith.select %28, %26, %30 : vector<2x16xi1>, vector<2x16xf32>
    %32 = arith.maximumf %22, %31 : vector<2x16xf32>
    %c3 = arith.constant 3 : index
    %c0_21 = arith.constant 0 : index
    %c0_22 = arith.constant 0 : index
    %33 = vector.load %arg2[%c3, %c0_21, %c0_22] : memref<4x32x16xf32, #tpu.memory_space<vmem>>, vector<1x32x16xf32>
    %34 = vector.shape_cast %33 : vector<1x32x16xf32> to vector<32x16xf32>
    %cst_23 = arith.constant dense<0.000000e+00> : vector<2x16xf32>
    %35 = tpu.matmul %2, %34, %cst_23 {dimension_numbers = #tpu.dot_dimension_numbers<[1], [0], [0], [1], [0, 0, 1, 1], [], []>} : vector<2x32xf32>, vector<32x16xf32>, vector<2x16xf32> -> vector<2x16xf32>
    %36 = arith.addf %3, %35 : vector<2x16xf32>
    %cst_24 = arith.constant 0.000000e+00 : f32
    %37 = vector.broadcast %cst_24 : f32 to vector<2x16xf32>
    %38 = arith.cmpf oge, %36, %37 : vector<2x16xf32>
    %cst_25 = arith.constant 2.000000e-01 : f32
    %39 = vector.broadcast %cst_25 : f32 to vector<2x16xf32>
    %40 = arith.mulf %39, %36 : vector<2x16xf32>
    %41 = arith.select %38, %36, %40 : vector<2x16xi1>, vector<2x16xf32>
    %42 = arith.maximumf %32, %41 : vector<2x16xf32>
    %43 = arith.subf %12, %42 : vector<2x16xf32>
    %44 = math.exp %43 : vector<2x16xf32>
    %45 = arith.subf %21, %42 : vector<2x16xf32>
    %46 = math.exp %45 : vector<2x16xf32>
    %47 = arith.subf %31, %42 : vector<2x16xf32>
    %48 = math.exp %47 : vector<2x16xf32>
    %49 = arith.subf %41, %42 : vector<2x16xf32>
    %50 = math.exp %49 : vector<2x16xf32>
    %51 = arith.addf %44, %46 : vector<2x16xf32>
    %52 = arith.addf %51, %48 : vector<2x16xf32>
    %53 = arith.addf %52, %50 : vector<2x16xf32>
    %54 = tpu.reciprocal %53 {approx = true} : vector<2x16xf32> -> vector<2x16xf32>
    %cst_26 = arith.constant 0.000000e+00 : f32
    %55 = vector.broadcast %cst_26 : f32 to vector<32x16xf32>
    %56 = arith.mulf %44, %54 : vector<2x16xf32>
    %cst_27 = arith.constant dense<0.000000e+00> : vector<16xf32>
    %57 = vector.multi_reduction <add>, %56, %cst_27 [0] : vector<2x16xf32> to vector<16xf32>
    %58 = vector.shape_cast %57 : vector<16xf32> to vector<1x16xf32>
    %c0_28 = arith.constant 0 : index
    %c0_29 = arith.constant 0 : index
    %c0_30 = arith.constant 0 : index
    %59 = vector.load %arg2[%c0_28, %c0_29, %c0_30] : memref<4x32x16xf32, #tpu.memory_space<vmem>>, vector<1x32x16xf32>
    %60 = vector.shape_cast %59 : vector<1x32x16xf32> to vector<32x16xf32>
    %61 = vector.broadcast %58 : vector<1x16xf32> to vector<32x16xf32>
    %62 = arith.mulf %61, %60 : vector<32x16xf32>
    %63 = arith.addf %55, %62 : vector<32x16xf32>
    %64 = arith.mulf %46, %54 : vector<2x16xf32>
    %cst_31 = arith.constant dense<0.000000e+00> : vector<16xf32>
    %65 = vector.multi_reduction <add>, %64, %cst_31 [0] : vector<2x16xf32> to vector<16xf32>
    %66 = vector.shape_cast %65 : vector<16xf32> to vector<1x16xf32>
    %c1_32 = arith.constant 1 : index
    %c0_33 = arith.constant 0 : index
    %c0_34 = arith.constant 0 : index
    %67 = vector.load %arg2[%c1_32, %c0_33, %c0_34] : memref<4x32x16xf32, #tpu.memory_space<vmem>>, vector<1x32x16xf32>
    %68 = vector.shape_cast %67 : vector<1x32x16xf32> to vector<32x16xf32>
    %69 = vector.broadcast %66 : vector<1x16xf32> to vector<32x16xf32>
    %70 = arith.mulf %69, %68 : vector<32x16xf32>
    %71 = arith.addf %63, %70 : vector<32x16xf32>
    %72 = arith.mulf %48, %54 : vector<2x16xf32>
    %cst_35 = arith.constant dense<0.000000e+00> : vector<16xf32>
    %73 = vector.multi_reduction <add>, %72, %cst_35 [0] : vector<2x16xf32> to vector<16xf32>
    %74 = vector.shape_cast %73 : vector<16xf32> to vector<1x16xf32>
    %c2_36 = arith.constant 2 : index
    %c0_37 = arith.constant 0 : index
    %c0_38 = arith.constant 0 : index
    %75 = vector.load %arg2[%c2_36, %c0_37, %c0_38] : memref<4x32x16xf32, #tpu.memory_space<vmem>>, vector<1x32x16xf32>
    %76 = vector.shape_cast %75 : vector<1x32x16xf32> to vector<32x16xf32>
    %77 = vector.broadcast %74 : vector<1x16xf32> to vector<32x16xf32>
    %78 = arith.mulf %77, %76 : vector<32x16xf32>
    %79 = arith.addf %71, %78 : vector<32x16xf32>
    %80 = arith.mulf %50, %54 : vector<2x16xf32>
    %cst_39 = arith.constant dense<0.000000e+00> : vector<16xf32>
    %81 = vector.multi_reduction <add>, %80, %cst_39 [0] : vector<2x16xf32> to vector<16xf32>
    %82 = vector.shape_cast %81 : vector<16xf32> to vector<1x16xf32>
    %c3_40 = arith.constant 3 : index
    %c0_41 = arith.constant 0 : index
    %c0_42 = arith.constant 0 : index
    %83 = vector.load %arg2[%c3_40, %c0_41, %c0_42] : memref<4x32x16xf32, #tpu.memory_space<vmem>>, vector<1x32x16xf32>
    %84 = vector.shape_cast %83 : vector<1x32x16xf32> to vector<32x16xf32>
    %85 = vector.broadcast %82 : vector<1x16xf32> to vector<32x16xf32>
    %86 = arith.mulf %85, %84 : vector<32x16xf32>
    %87 = arith.addf %79, %86 : vector<32x16xf32>
    %cst_43 = arith.constant 5.000000e-01 : f32
    %88 = vector.broadcast %cst_43 : f32 to vector<32x16xf32>
    %89 = arith.mulf %87, %88 : vector<32x16xf32>
    %90 = arith.negf %89 : vector<32x16xf32>
    %91 = math.exp %90 : vector<32x16xf32>
    %cst_44 = arith.constant 1.000000e+00 : f32
    %92 = vector.broadcast %cst_44 : f32 to vector<32x16xf32>
    %93 = arith.addf %92, %91 : vector<32x16xf32>
    %94 = arith.divf %92, %93 : vector<32x16xf32>
    %c0_45 = arith.constant 0 : index
    %c0_46 = arith.constant 0 : index
    %95 = vector.load %arg5[%c0_45, %c0_46] : memref<32x16xf32, #tpu.memory_space<vmem>>, vector<32x16xf32>
    tpu.vector_store %arg5[%c0_45, %c0_46], %94 {strides = array<i32>} : memref<32x16xf32, #tpu.memory_space<vmem>>, vector<32x16xf32>,
    return
  }
  func.func @transform_0(%arg0: i32) -> (i32, i32) {
    %c0_i32 = arith.constant 0 : i32
    %c0_i32_0 = arith.constant 0 : i32
    return %c0_i32, %arg0 : i32, i32
  }
  func.func @transform_1(%arg0: i32) -> (i32, i32, i32) {
    %c0_i32 = arith.constant 0 : i32
    %c0_i32_0 = arith.constant 0 : i32
    %c0_i32_1 = arith.constant 0 : i32
    return %c0_i32, %c0_i32_0, %arg0 : i32, i32, i32
  }
  func.func @transform_2(%arg0: i32) -> (i32, i32) {
    %c0_i32 = arith.constant 0 : i32
    %c0_i32_0 = arith.constant 0 : i32
    %c0_i32_1 = arith.constant 0 : i32
    return %c0_i32, %c0_i32_0 : i32, i32
  }
  func.func @transform_3(%arg0: i32) -> (i32, i32) {
    %c0_i32 = arith.constant 0 : i32
    %c0_i32_0 = arith.constant 0 : i32
    %c0_i32_1 = arith.constant 0 : i32
    return %c0_i32, %c0_i32_0 : i32, i32
  }
  func.func @transform_4(%arg0: i32) -> (i32, i32) {
    %c0_i32 = arith.constant 0 : i32
    %c0_i32_0 = arith.constant 0 : i32
    return %c0_i32, %arg0 : i32, i32
  }
}

</mosaic_0001>

<llo_original>
// kernel: tpu_custom_call.1
$region0: #{tpu_custom_call.1}
  #allocation0 [shape = 'u32[]', space=smem, size = 0x4, offset = 0x4, fixed_abs, tag = 'smem constant byte address 0x4 - core index']
  #allocation1 [shape = 'u32[144,128]{1,0:T(1,128)}', space=vmem, size = 0x12000, scoped, tag = 'internal scratch']
  %s0 = inlined_call_operand.vmem [shape: f32[32,16], index: 0, kind: input, shape index: {}]
  %s1 = inlined_call_operand.vmem [shape: f32[4,32,16], index: 1, kind: input, shape index: {}]
  %s2 = inlined_call_operand.vmem [shape: f32[2,32], index: 2, kind: input, shape index: {}]
  %s3 = inlined_call_operand.vmem [shape: f32[2,32], index: 3, kind: input, shape index: {}]
  %s4 = inlined_call_operand.vmem [shape: f32[32,16], index: 4, kind: output, shape index: {}]
  %s5 = sld [smem:[#allocation0]]
  $region26: #{tpu_custom_call.1} parent=0
    _
  %s7 = ssub.s32 1, %s5
  %s8 = scalar_select 0, %s7, %s5
  // Predicated region
  $region2: #{tpu_custom_call.1} parent=0 // pred_check
    _
  $region3: #{tpu_custom_call.1} parent=0 // pred_check_branch
    %10 = sbr.rel (0) target = $region5
  $region4: #{tpu_custom_call.1} parent=0 // pred_region
    _
  $region5: #{tpu_custom_call.1} parent=0 // pred_fallthru
    _
  // Predicated region
  $region6: #{tpu_custom_call.1} parent=0 // pred_check
    _
  $region7: #{tpu_custom_call.1} parent=0 // pred_check_branch
    %12 = sbr.rel (0) target = $region9
  $region8: #{tpu_custom_call.1} parent=0 // pred_region
    _
  $region9: #{tpu_custom_call.1} parent=0 // pred_fallthru
    _
  // Predicated region
  $region10: #{tpu_custom_call.1} parent=0 // pred_check
    _
  $region11: #{tpu_custom_call.1} parent=0 // pred_check_branch
    %14 = sbr.rel (0) target = $region13
  $region12: #{tpu_custom_call.1} parent=0 // pred_region
    _
  $region13: #{tpu_custom_call.1} parent=0 // pred_fallthru
    _
  // Predicated region
  $region14: #{tpu_custom_call.1} parent=0 // pred_check
    _
  $region15: #{tpu_custom_call.1} parent=0 // pred_check_branch
    %16 = sbr.rel (0) target = $region17
  $region16: #{tpu_custom_call.1} parent=0 // pred_region
    _
  $region17: #{tpu_custom_call.1} parent=0 // pred_fallthru
    _
  %v17 = vld [vmem:[%s0] sm:$0xff]
  %v18 = vld [vmem:[%s0 + $0x8] sm:$0xff]
  %v19 = vld [vmem:[%s0 + $0x10] sm:$0xff]
  %v20 = vld [vmem:[%s0 + $0x18] sm:$0xff]
  %v21 = vld [vmem:[%s2] sm:$0x3]
  %v22 = vld [vmem:[%s3] sm:$0x3]
  %vm23 = vcmask 261120
  %v25 = vsel %vm23, %v21, 0
  %27 = vmatprep.subr.mxu0 0.0
  %28 = vmatpush1.msra.mxu0 %v17
  %29 = vmatprep.subr.mxu0 0.0
  %30 = vmatpush1.msra.mxu0 %v18
  %31 = vmatprep.subr.mxu0 0.0
  %32 = vmatpush1.msra.mxu0 %v19
  %33 = vmatprep.subr.mxu0 0.0
  %34 = vmatpush1.msra.mxu0 %v20
  %35 = vmatprep.subr.mxu0 0.0
  %36 = vmatpush1.msra.mxu0 0.0
  %37 = vmatprep.subr.mxu0 0.0
  %38 = vmatpush1.msra.mxu0 0.0
  %39 = vmatprep.subr.mxu0 0.0
  %40 = vmatpush1.msra.mxu0 0.0
  %41 = vmatprep.subr.mxu0 0.0
  %42 = vmatpush1.msra.mxu0 0.0
  %43 = vmatprep.subr.mxu0 0.0
  %44 = vmatpush1.msra.mxu0 0.0
  %45 = vmatprep.subr.mxu0 0.0
  %46 = vmatpush1.msra.mxu0 0.0
  %47 = vmatprep.subr.mxu0 0.0
  %48 = vmatpush1.msra.mxu0 0.0
  %49 = vmatprep.subr.mxu0 0.0
  %50 = vmatpush1.msra.mxu0 0.0
  %51 = vmatprep.subr.mxu0 0.0
  %52 = vmatpush1.msra.mxu0 0.0
  %53 = vmatprep.subr.mxu0 0.0
  %54 = vmatpush1.msra.mxu0 0.0
  %55 = vmatprep.subr.mxu0 0.0
  %56 = vmatpush1.msra.mxu0 0.0
  %57 = vmatprep.subr.mxu0 0.0
  %58 = vmatpush1.msra.mxu0 0.0
  %59 = vmatprep.subr.mxu0 0.0
  %60 = vmatpush1.msra.mxu0 0.0
  %61 = vmatprep.subr.mxu0 0.0
  %62 = vmatpush1.msra.mxu0 0.0
  %63 = vmatprep.subr.mxu0 0.0
  %64 = vmatpush1.msra.mxu0 0.0
  %65 = vmatprep.subr.mxu0 0.0
  %66 = vmatpush1.msra.mxu0 0.0
  %67 = vmatprep.subr.mxu0 0.0
  %68 = vmatpush1.msra.mxu0 0.0
  %69 = vmatprep.subr.mxu0 0.0
  %70 = vmatpush1.msra.mxu0 0.0
  %71 = vmatprep.subr.mxu0 0.0
  %72 = vmatpush1.msra.mxu0 0.0
  %73 = vmatprep.subr.mxu0 0.0
  %74 = vmatpush1.msra.mxu0 0.0
  %75 = vmatprep.subr.mxu0 0.0
  %76 = vmatpush1.msra.mxu0 0.0
  %77 = vmatprep.subr.mxu0 0.0
  %78 = vmatpush1.msra.mxu0 0.0
  %79 = vmatprep.subr.mxu0 0.0
  %80 = vmatpush1.msra.mxu0 0.0
  %81 = vmatprep.subr.mxu0 0.0
  %82 = vmatpush1.msra.mxu0 0.0
  %83 = vmatprep.subr.mxu0 0.0
  %84 = vmatpush1.msra.mxu0 0.0
  %85 = vmatprep.subr.mxu0 0.0
  %86 = vmatpush1.msra.mxu0 0.0
  %87 = vmatprep.subr.mxu0 0.0
  %88 = vmatpush1.msra.mxu0 0.0
  %89 = vmatprep.subr.mxu0 0.0
  %90 = vmatpush1.msra.mxu0 0.0
  %91 = vmatprep.mubr.f32.mxu0 0.0
  %92 = vmatmul.mubr.f32.gmra.mrb[0].mxu0 %v25
  %v93 = vpop.f32.mrb[0].mxu0
  %v94 = vadd.f32 0.0, %v93
  %v95 = vpop.f32.mrb[0].mxu0
  %96 = vdwg.mxu0
  %v97 = vld [vmem:[%s1] sm:$0xff]
  %v98 = vld [vmem:[%s1 + $0x8] sm:$0xff]
  %v99 = vld [vmem:[%s1 + $0x10] sm:$0xff]
  %v100 = vld [vmem:[%s1 + $0x18] sm:$0xff]
  %v102 = vsel %vm23, %v22, 0
  %104 = vmatprep.subr.mxu0 0.0
  %105 = vmatpush1.msra.mxu0 %v97
  %106 = vmatprep.subr.mxu0 0.0
  %107 = vmatpush1.msra.mxu0 %v98
  %108 = vmatprep.subr.mxu0 0.0
  %109 = vmatpush1.msra.mxu0 %v99
  %110 = vmatprep.subr.mxu0 0.0
  %111 = vmatpush1.msra.mxu0 %v100
  %112 = vmatprep.subr.mxu0 0.0
  %113 = vmatpush1.msra.mxu0 0.0
  %114 = vmatprep.subr.mxu0 0.0
  %115 = vmatpush1.msra.mxu0 0.0
  %116 = vmatprep.subr.mxu0 0.0
  %117 = vmatpush1.msra.mxu0 0.0
  %118 = vmatprep.subr.mxu0 0.0
  %119 = vmatpush1.msra.mxu0 0.0
  %120 = vmatprep.subr.mxu0 0.0
  %121 = vmatpush1.msra.mxu0 0.0
  %122 = vmatprep.subr.mxu0 0.0
  %123 = vmatpush1.msra.mxu0 0.0
  %124 = vmatprep.subr.mxu0 0.0
  %125 = vmatpush1.msra.mxu0 0.0
  %126 = vmatprep.subr.mxu0 0.0
  %127 = vmatpush1.msra.mxu0 0.0
  %128 = vmatprep.subr.mxu0 0.0
  %129 = vmatpush1.msra.mxu0 0.0
  %130 = vmatprep.subr.mxu0 0.0
  %131 = vmatpush1.msra.mxu0 0.0
  %132 = vmatprep.subr.mxu0 0.0
  %133 = vmatpush1.msra.mxu0 0.0
  %134 = vmatprep.subr.mxu0 0.0
  %135 = vmatpush1.msra.mxu0 0.0
  %136 = vmatprep.subr.mxu0 0.0
  %137 = vmatpush1.msra.mxu0 0.0
  %138 = vmatprep.subr.mxu0 0.0
  %139 = vmatpush1.msra.mxu0 0.0
  %140 = vmatprep.subr.mxu0 0.0
  %141 = vmatpush1.msra.mxu0 0.0
  %142 = vmatprep.subr.mxu0 0.0
  %143 = vmatpush1.msra.mxu0 0.0
  %144 = vmatprep.subr.mxu0 0.0
  %145 = vmatpush1.msra.mxu0 0.0
  %146 = vmatprep.subr.mxu0 0.0
  %147 = vmatpush1.msra.mxu0 0.0
  %148 = vmatprep.subr.mxu0 0.0
  %149 = vmatpush1.msra.mxu0 0.0
  %150 = vmatprep.subr.mxu0 0.0
  %151 = vmatpush1.msra.mxu0 0.0
  %152 = vmatprep.subr.mxu0 0.0
  %153 = vmatpush1.msra.mxu0 0.0
  %154 = vmatprep.subr.mxu0 0.0
  %155 = vmatpush1.msra.mxu0 0.0
  %156 = vmatprep.subr.mxu0 0.0
  %157 = vmatpush1.msra.mxu0 0.0
  %158 = vmatprep.subr.mxu0 0.0
  %159 = vmatpush1.msra.mxu0 0.0
  %160 = vmatprep.subr.mxu0 0.0
  %161 = vmatpush1.msra.mxu0 0.0
  %162 = vmatprep.subr.mxu0 0.0
  %163 = vmatpush1.msra.mxu0 0.0
  %164 = vmatprep.subr.mxu0 0.0
  %165 = vmatpush1.msra.mxu0 0.0
  %166 = vmatprep.subr.mxu0 0.0
  %167 = vmatpush1.msra.mxu0 0.0
  %168 = vmatprep.mubr.f32.mxu0 0.0
  %169 = vmatmul.mubr.f32.gmra.mrb[0].mxu0 %v102
  %v170 = vpop.f32.mrb[0].mxu0
  %v171 = vadd.f32 0.0, %v170
  %v172 = vpop.f32.mrb[0].mxu0
  %173 = vdwg.mxu0
  %v174 = vadd.f32 %v94, %v171
  %vm175 = vcmp.ge.f32.partialorder %v174, 0.0
  %v176 = vmul.f32 %v174, 0.2
  %v177 = vsel %vm175, %v174, %v176
  %s178 = scalar_lea.vmem %s1, 32
  %v179 = vld [vmem:[%s178] sm:$0xff]
  %v180 = vld [vmem:[%s178 + $0x8] sm:$0xff]
  %v181 = vld [vmem:[%s178 + $0x10] sm:$0xff]
  %v182 = vld [vmem:[%s178 + $0x18] sm:$0xff]
  %183 = vmatprep.subr.mxu0 0.0
  %184 = vmatpush1.msra.mxu0 %v179
  %185 = vmatprep.subr.mxu0 0.0
  %186 = vmatpush1.msra.mxu0 %v180
  %187 = vmatprep.subr.mxu0 0.0
  %188 = vmatpush1.msra.mxu0 %v181
  %189 = vmatprep.subr.mxu0 0.0
  %190 = vmatpush1.msra.mxu0 %v182
  %191 = vmatprep.subr.mxu0 0.0
  %192 = vmatpush1.msra.mxu0 0.0
  %193 = vmatprep.subr.mxu0 0.0
  %194 = vmatpush1.msra.mxu0 0.0
  %195 = vmatprep.subr.mxu0 0.0
  %196 = vmatpush1.msra.mxu0 0.0
  %197 = vmatprep.subr.mxu0 0.0
  %198 = vmatpush1.msra.mxu0 0.0
  %199 = vmatprep.subr.mxu0 0.0
  %200 = vmatpush1.msra.mxu0 0.0
  %201 = vmatprep.subr.mxu0 0.0
  %202 = vmatpush1.msra.mxu0 0.0
  %203 = vmatprep.subr.mxu0 0.0
  %204 = vmatpush1.msra.mxu0 0.0
  %205 = vmatprep.subr.mxu0 0.0
  %206 = vmatpush1.msra.mxu0 0.0
  %207 = vmatprep.subr.mxu0 0.0
  %208 = vmatpush1.msra.mxu0 0.0
  %209 = vmatprep.subr.mxu0 0.0
  %210 = vmatpush1.msra.mxu0 0.0
  %211 = vmatprep.subr.mxu0 0.0
  %212 = vmatpush1.msra.mxu0 0.0
  %213 = vmatprep.subr.mxu0 0.0
  %214 = vmatpush1.msra.mxu0 0.0
  %215 = vmatprep.subr.mxu0 0.0
  %216 = vmatpush1.msra.mxu0 0.0
  %217 = vmatprep.subr.mxu0 0.0
  %218 = vmatpush1.msra.mxu0 0.0
  %219 = vmatprep.subr.mxu0 0.0
  %220 = vmatpush1.msra.mxu0 0.0
  %221 = vmatprep.subr.mxu0 0.0
  %222 = vmatpush1.msra.mxu0 0.0
  %223 = vmatprep.subr.mxu0 0.0
  %224 = vmatpush1.msra.mxu0 0.0
  %225 = vmatprep.subr.mxu0 0.0
  %226 = vmatpush1.msra.mxu0 0.0
  %227 = vmatprep.subr.mxu0 0.0
  %228 = vmatpush1.msra.mxu0 0.0
  %229 = vmatprep.subr.mxu0 0.0
  %230 = vmatpush1.msra.mxu0 0.0
  %231 = vmatprep.subr.mxu0 0.0
  %232 = vmatpush1.msra.mxu0 0.0
  %233 = vmatprep.subr.mxu0 0.0
  %234 = vmatpush1.msra.mxu0 0.0
  %235 = vmatprep.subr.mxu0 0.0
  %236 = vmatpush1.msra.mxu0 0.0
  %237 = vmatprep.subr.mxu0 0.0
  %238 = vmatpush1.msra.mxu0 0.0
  %239 = vmatprep.subr.mxu0 0.0
  %240 = vmatpush1.msra.mxu0 0.0
  %241 = vmatprep.subr.mxu0 0.0
  %242 = vmatpush1.msra.mxu0 0.0
  %243 = vmatprep.subr.mxu0 0.0
  %244 = vmatpush1.msra.mxu0 0.0
  %245 = vmatprep.subr.mxu0 0.0
  %246 = vmatpush1.msra.mxu0 0.0
  %247 = vmatprep.mubr.f32.mxu0 0.0
  %248 = vmatmul.mubr.f32.gmra.mrb[0].mxu0 %v102
  %v249 = vpop.f32.mrb[0].mxu0
  %v250 = vadd.f32 0.0, %v249
  %v251 = vpop.f32.mrb[0].mxu0
  %252 = vdwg.mxu0
  %v253 = vadd.f32 %v94, %v250
  %vm254 = vcmp.ge.f32.partialorder %v253, 0.0
  %v255 = vmul.f32 %v253, 0.2
  %v256 = vsel %vm254, %v253, %v255
  %v257 = vmax.f32 %v177, %v256
  %s258 = scalar_lea.vmem %s1, 64
  %v259 = vld [vmem:[%s258] sm:$0xff]
  %v260 = vld [vmem:[%s258 + $0x8] sm:$0xff]
  %v261 = vld [vmem:[%s258 + $0x10] sm:$0xff]
  %v262 = vld [vmem:[%s258 + $0x18] sm:$0xff]
  %263 = vmatprep.subr.mxu0 0.0
  %264 = vmatpush1.msra.mxu0 %v259
  %265 = vmatprep.subr.mxu0 0.0
  %266 = vmatpush1.msra.mxu0 %v260
  %267 = vmatprep.subr.mxu0 0.0
  %268 = vmatpush1.msra.mxu0 %v261
  %269 = vmatprep.subr.mxu0 0.0
  %270 = vmatpush1.msra.mxu0 %v262
  %271 = vmatprep.subr.mxu0 0.0
  %272 = vmatpush1.msra.mxu0 0.0
  %273 = vmatprep.subr.mxu0 0.0
  %274 = vmatpush1.msra.mxu0 0.0
  %275 = vmatprep.subr.mxu0 0.0
  %276 = vmatpush1.msra.mxu0 0.0
  %277 = vmatprep.subr.mxu0 0.0
  %278 = vmatpush1.msra.mxu0 0.0
  %279 = vmatprep.subr.mxu0 0.0
  %280 = vmatpush1.msra.mxu0 0.0
  %281 = vmatprep.subr.mxu0 0.0
  %282 = vmatpush1.msra.mxu0 0.0
  %283 = vmatprep.subr.mxu0 0.0
  %284 = vmatpush1.msra.mxu0 0.0
  %285 = vmatprep.subr.mxu0 0.0
  %286 = vmatpush1.msra.mxu0 0.0
  %287 = vmatprep.subr.mxu0 0.0
  %288 = vmatpush1.msra.mxu0 0.0
  %289 = vmatprep.subr.mxu0 0.0
  %290 = vmatpush1.msra.mxu0 0.0
  %291 = vmatprep.subr.mxu0 0.0
  %292 = vmatpush1.msra.mxu0 0.0
  %293 = vmatprep.subr.mxu0 0.0
  %294 = vmatpush1.msra.mxu0 0.0
  %295 = vmatprep.subr.mxu0 0.0
  %296 = vmatpush1.msra.mxu0 0.0
  %297 = vmatprep.subr.mxu0 0.0
  %298 = vmatpush1.msra.mxu0 0.0
  %299 = vmatprep.subr.mxu0 0.0
  %300 = vmatpush1.msra.mxu0 0.0
  %301 = vmatprep.subr.mxu0 0.0
  %302 = vmatpush1.msra.mxu0 0.0
  %303 = vmatprep.subr.mxu0 0.0
  %304 = vmatpush1.msra.mxu0 0.0
  %305 = vmatprep.subr.mxu0 0.0
  %306 = vmatpush1.msra.mxu0 0.0
  %307 = vmatprep.subr.mxu0 0.0
  %308 = vmatpush1.msra.mxu0 0.0
  %309 = vmatprep.subr.mxu0 0.0
  %310 = vmatpush1.msra.mxu0 0.0
  %311 = vmatprep.subr.mxu0 0.0
  %312 = vmatpush1.msra.mxu0 0.0
  %313 = vmatprep.subr.mxu0 0.0
  %314 = vmatpush1.msra.mxu0 0.0
  %315 = vmatprep.subr.mxu0 0.0
  %316 = vmatpush1.msra.mxu0 0.0
  %317 = vmatprep.subr.mxu0 0.0
  %318 = vmatpush1.msra.mxu0 0.0
  %319 = vmatprep.subr.mxu0 0.0
  %320 = vmatpush1.msra.mxu0 0.0
  %321 = vmatprep.subr.mxu0 0.0
  %322 = vmatpush1.msra.mxu0 0.0
  %323 = vmatprep.subr.mxu0 0.0
  %324 = vmatpush1.msra.mxu0 0.0
  %325 = vmatprep.subr.mxu0 0.0
  %326 = vmatpush1.msra.mxu0 0.0
  %327 = vmatprep.mubr.f32.mxu0 0.0
  %328 = vmatmul.mubr.f32.gmra.mrb[0].mxu0 %v102
  %v329 = vpop.f32.mrb[0].mxu0
  %v330 = vadd.f32 0.0, %v329
  %v331 = vpop.f32.mrb[0].mxu0
  %332 = vdwg.mxu0
  %v333 = vadd.f32 %v94, %v330
  %vm334 = vcmp.ge.f32.partialorder %v333, 0.0
  %v335 = vmul.f32 %v333, 0.2
  %v336 = vsel %vm334, %v333, %v335
  %v337 = vmax.f32 %v257, %v336
  %s338 = scalar_lea.vmem %s1, 96
  %v339 = vld [vmem:[%s338] sm:$0xff]
  %v340 = vld [vmem:[%s338 + $0x8] sm:$0xff]
  %v341 = vld [vmem:[%s338 + $0x10] sm:$0xff]
  %v342 = vld [vmem:[%s338 + $0x18] sm:$0xff]
  %343 = vmatprep.subr.mxu0 0.0
  %344 = vmatpush1.msra.mxu0 %v339
  %345 = vmatprep.subr.mxu0 0.0
  %346 = vmatpush1.msra.mxu0 %v340
  %347 = vmatprep.subr.mxu0 0.0
  %348 = vmatpush1.msra.mxu0 %v341
  %349 = vmatprep.subr.mxu0 0.0
  %350 = vmatpush1.msra.mxu0 %v342
  %351 = vmatprep.subr.mxu0 0.0
  %352 = vmatpush1.msra.mxu0 0.0
  %353 = vmatprep.subr.mxu0 0.0
  %354 = vmatpush1.msra.mxu0 0.0
  %355 = vmatprep.subr.mxu0 0.0
  %356 = vmatpush1.msra.mxu0 0.0
  %357 = vmatprep.subr.mxu0 0.0
  %358 = vmatpush1.msra.mxu0 0.0
  %359 = vmatprep.subr.mxu0 0.0
  %360 = vmatpush1.msra.mxu0 0.0
  %361 = vmatprep.subr.mxu0 0.0
  %362 = vmatpush1.msra.mxu0 0.0
  %363 = vmatprep.subr.mxu0 0.0
  %364 = vmatpush1.msra.mxu0 0.0
  %365 = vmatprep.subr.mxu0 0.0
  %366 = vmatpush1.msra.mxu0 0.0
  %367 = vmatprep.subr.mxu0 0.0
  %368 = vmatpush1.msra.mxu0 0.0
  %369 = vmatprep.subr.mxu0 0.0
  %370 = vmatpush1.msra.mxu0 0.0
  %371 = vmatprep.subr.mxu0 0.0
  %372 = vmatpush1.msra.mxu0 0.0
  %373 = vmatprep.subr.mxu0 0.0
  %374 = vmatpush1.msra.mxu0 0.0
  %375 = vmatprep.subr.mxu0 0.0
  %376 = vmatpush1.msra.mxu0 0.0
  %377 = vmatprep.subr.mxu0 0.0
  %378 = vmatpush1.msra.mxu0 0.0
  %379 = vmatprep.subr.mxu0 0.0
  %380 = vmatpush1.msra.mxu0 0.0
  %381 = vmatprep.subr.mxu0 0.0
  %382 = vmatpush1.msra.mxu0 0.0
  %383 = vmatprep.subr.mxu0 0.0
  %384 = vmatpush1.msra.mxu0 0.0
  %385 = vmatprep.subr.mxu0 0.0
  %386 = vmatpush1.msra.mxu0 0.0
  %387 = vmatprep.subr.mxu0 0.0
  %388 = vmatpush1.msra.mxu0 0.0
  %389 = vmatprep.subr.mxu0 0.0
  %390 = vmatpush1.msra.mxu0 0.0
  %391 = vmatprep.subr.mxu0 0.0
  %392 = vmatpush1.msra.mxu0 0.0
  %393 = vmatprep.subr.mxu0 0.0
  %394 = vmatpush1.msra.mxu0 0.0
  %395 = vmatprep.subr.mxu0 0.0
  %396 = vmatpush1.msra.mxu0 0.0
  %397 = vmatprep.subr.mxu0 0.0
  %398 = vmatpush1.msra.mxu0 0.0
  %399 = vmatprep.subr.mxu0 0.0
  %400 = vmatpush1.msra.mxu0 0.0
  %401 = vmatprep.subr.mxu0 0.0
  %402 = vmatpush1.msra.mxu0 0.0
  %403 = vmatprep.subr.mxu0 0.0
  %404 = vmatpush1.msra.mxu0 0.0
  %405 = vmatprep.subr.mxu0 0.0
  %406 = vmatpush1.msra.mxu0 0.0
  %407 = vmatprep.mubr.f32.mxu0 0.0
  %408 = vmatmul.mubr.f32.gmra.mrb[0].mxu0 %v102
  %v409 = vpop.f32.mrb[0].mxu0
  %v410 = vadd.f32 0.0, %v409
  %v411 = vpop.f32.mrb[0].mxu0
  %412 = vdwg.mxu0
  %v413 = vadd.f32 %v94, %v410
  %vm414 = vcmp.ge.f32.partialorder %v413, 0.0
  %v415 = vmul.f32 %v413, 0.2
  %v416 = vsel %vm414, %v413, %v415
  %v417 = vmax.f32 %v337, %v416
  %v418 = vsub.f32 %v177, %v417
  %v419 = vmul.f32 %v418, 1.442695
  %v420 = vpow.pop %v419
  %v421 = vsub.f32 %v256, %v417
  %v422 = vmul.f32 %v421, 1.442695
  %v423 = vpow.pop %v422
  %v424 = vsub.f32 %v336, %v417
  %v425 = vmul.f32 %v424, 1.442695
  %v426 = vpow.pop %v425
  %v427 = vsub.f32 %v416, %v417
  %v428 = vmul.f32 %v427, 1.442695
  %v429 = vpow.pop %v428
  %v430 = vadd.f32 %v420, %v423
  %v431 = vadd.f32 %v430, %v426
  %v432 = vadd.f32 %v431, %v429
  %v433 = vrcp.pop %v432
  %v434 = vmul.f32 %v420, %v433
  %vm435 = vcmask 123904
  %v436 = vsel %vm435, %v434, 0.0
  %v437 = vrot.slane %v436, 4
  %v438 = vadd.f32 %v436, %v437
  %v439 = vrot.slane %v438, 2
  %v440 = vadd.f32 %v438, %v439
  %v441 = vrot.slane %v440, 1
  %v442 = vadd.f32 %v440, %v441
  %v443 = vmul.f32 %v442, %v97
  %v444 = vmul.f32 %v442, %v98
  %v445 = vmul.f32 %v442, %v99
  %v446 = vmul.f32 %v442, %v100
  %v447 = vadd.f32 %v443, 0.0
  %v448 = vadd.f32 %v444, 0.0
  %v449 = vadd.f32 %v445, 0.0
  %v450 = vadd.f32 %v446, 0.0
  %v451 = vmul.f32 %v423, %v433
  %v452 = vsel %vm435, %v451, 0.0
  %v453 = vrot.slane %v452, 4
  %v454 = vadd.f32 %v452, %v453
  %v455 = vrot.slane %v454, 2
  %v456 = vadd.f32 %v454, %v455
  %v457 = vrot.slane %v456, 1
  %v458 = vadd.f32 %v456, %v457
  %v459 = vmul.f32 %v458, %v179
  %v460 = vmul.f32 %v458, %v180
  %v461 = vmul.f32 %v458, %v181
  %v462 = vmul.f32 %v458, %v182
  %v463 = vadd.f32 %v447, %v459
  %v464 = vadd.f32 %v448, %v460
  %v465 = vadd.f32 %v449, %v461
  %v466 = vadd.f32 %v450, %v462
  %v467 = vmul.f32 %v426, %v433
  %v468 = vsel %vm435, %v467, 0.0
  %v469 = vrot.slane %v468, 4
  %v470 = vadd.f32 %v468, %v469
  %v471 = vrot.slane %v470, 2
  %v472 = vadd.f32 %v470, %v471
  %v473 = vrot.slane %v472, 1
  %v474 = vadd.f32 %v472, %v473
  %v475 = vmul.f32 %v474, %v259
  %v476 = vmul.f32 %v474, %v260
  %v477 = vmul.f32 %v474, %v261
  %v478 = vmul.f32 %v474, %v262
  %v479 = vadd.f32 %v463, %v475
  %v480 = vadd.f32 %v464, %v476
  %v481 = vadd.f32 %v465, %v477
  %v482 = vadd.f32 %v466, %v478
  %v483 = vmul.f32 %v429, %v433
  %v484 = vsel %vm435, %v483, 0.0
  %v485 = vrot.slane %v484, 4
  %v486 = vadd.f32 %v484, %v485
  %v487 = vrot.slane %v486, 2
  %v488 = vadd.f32 %v486, %v487
  %v489 = vrot.slane %v488, 1
  %v490 = vadd.f32 %v488, %v489
  %v491 = vmul.f32 %v490, %v339
  %v492 = vmul.f32 %v490, %v340
  %v493 = vmul.f32 %v490, %v341
  %v494 = vmul.f32 %v490, %v342
  %v495 = vadd.f32 %v479, %v491
  %v496 = vadd.f32 %v480, %v492
  %v497 = vadd.f32 %v481, %v493
  %v498 = vadd.f32 %v482, %v494
  %v499 = vmul.f32 %v495, 0.5
  %v500 = vmul.f32 %v496, 0.5
  %v501 = vmul.f32 %v497, 0.5
  %v502 = vmul.f32 %v498, 0.5
  %v503 = vxor.u32 %v499, 2147483648
  %v504 = vxor.u32 %v500, 2147483648
  %v505 = vxor.u32 %v501, 2147483648
  %v506 = vxor.u32 %v502, 2147483648
  %v507 = vmul.f32 %v503, 1.442695
  %v508 = vpow.pop %v507
  %v509 = vmul.f32 %v504, 1.442695
  %v510 = vpow.pop %v509
  %v511 = vmul.f32 %v505, 1.442695
  %v512 = vpow.pop %v511
  %v513 = vmul.f32 %v506, 1.442695
  %v514 = vpow.pop %v513
  %v515 = vadd.f32 %v508, 1.0
  %v516 = vadd.f32 %v510, 1.0
  %v517 = vadd.f32 %v512, 1.0
  %v518 = vadd.f32 %v514, 1.0
  %v519 = vrcp.pop %v515
  %v520 = vmul.f32 1.0, %v519
  %v521 = vrcp.pop %v516
  %v522 = vmul.f32 1.0, %v521
  %v523 = vrcp.pop %v517
  %v524 = vmul.f32 1.0, %v523
  %v525 = vrcp.pop %v518
  %v526 = vmul.f32 1.0, %v525
  %vm527 = vcmask 130048
  %528 = vst.msk [vmem:[%s4] sm:$0xff] %vm527, %v520
  %529 = vst.msk [vmem:[%s4 + $0x8] sm:$0xff] %vm527, %v522
  %530 = vst.msk [vmem:[%s4 + $0x10] sm:$0xff] %vm527, %v524
  %531 = vst.msk [vmem:[%s4 + $0x18] sm:$0xff] %vm527, %v526
  // Predicated region
  $region18: #{tpu_custom_call.1} parent=0 // pred_check
    _
  $region19: #{tpu_custom_call.1} parent=0 // pred_check_branch
    %533 = sbr.rel (0) target = $region21
  $region20: #{tpu_custom_call.1} parent=0 // pred_region
    _
  $region21: #{tpu_custom_call.1} parent=0 // pred_fallthru
    _
  // Predicated region
  $region22: #{tpu_custom_call.1} parent=0 // pred_check
    _
  $region23: #{tpu_custom_call.1} parent=0 // pred_check_branch
    %535 = sbr.rel (0) target = $region25
  $region24: #{tpu_custom_call.1} parent=0 // pred_region
    _
  $region25: #{tpu_custom_call.1} parent=0 // pred_fallthru
    _

</llo_original>
